<compile_context>
chip_gen: v7x
topology: tpu7x:2x2x1
jax: 0.10.0
libtpu: 0.0.40
codegen_flags: <defaults>
</compile_context>

<pallas_src>
import math

import jax
import jax.numpy as jnp
from jax.experimental import pallas as pl
from jax.experimental.pallas import tpu as pltpu


def _make_mapping_kernel(num_hidden_layers):
    """(Linear -> LeakyReLU(0.2)) * num_hidden_layers -> Linear, fused output."""
    n_stacked = num_hidden_layers - 1  # hidden [H, H] layers stored stacked

    def kernel(*refs):
        if n_stacked > 0:
            (z_ref, w_in_ref, b_in_ref, w_h_ref, b_h_ref,
             w_out_ref, b_out_ref, out_ref) = refs
        else:
            z_ref, w_in_ref, b_in_ref, w_out_ref, b_out_ref, out_ref = refs
            w_h_ref = b_h_ref = None

        # First hidden layer (MXU, f32 accumulation).
        x = jnp.dot(z_ref[...], w_in_ref[...],
                    preferred_element_type=jnp.float32)
        x = x + b_in_ref[...].astype(jnp.float32)
        x = jnp.maximum(x, 0.2 * x)                    # LeakyReLU(0.2), VPU

        # Remaining hidden layers: static unrolled loop over stacked weights.
        for li in range(n_stacked):
            w = w_h_ref[li]                            # [H, H]
            b = b_h_ref[li]                            # [1, H]
            x = jnp.dot(x.astype(w_in_ref.dtype), w,
                        preferred_element_type=jnp.float32)
            x = x + b.astype(jnp.float32)
            x = jnp.maximum(x, 0.2 * x)

        # Output layer -> one lane-dense [TM, out_dim] slab (split outside).
        x = jnp.dot(x.astype(w_out_ref.dtype), w_out_ref[...],
                    preferred_element_type=jnp.float32)
        x = x + b_out_ref[...].astype(jnp.float32)
        out_ref[...] = x.astype(out_ref.dtype)

    return kernel


def custom_mapping_network_forward(z, params, *, block_m=128):
    """Run the full mapping MLP in one pallas_call, batch-tiled along rows.

    params = (w_in, b_in, w_hidden, b_hidden, w_out, b_out) with
      w_in: [in, H], b_in: [1, H],
      w_hidden: [Lh, H, H] or None, b_hidden: [Lh, 1, H] or None,
      w_out: [H, out_dim], b_out: [1, out_dim].
    Returns (frequencies, phase_shifts), each [B, out_dim // 2].
    """
    w_in, b_in, w_hidden, b_hidden, w_out, b_out = params
    B, in_features = z.shape
    H = w_in.shape[1]
    out_dim = w_out.shape[1]
    assert out_dim % 2 == 0, "map_output_dim must be even"
    n_stacked = 0 if w_hidden is None else w_hidden.shape[0]
    num_hidden_layers = n_stacked + 1

    # Batch tile; pad the batch to a multiple of the tile (sliced off below).
    tm = min(block_m, B)
    b_pad = pl.cdiv(B, tm) * tm
    z_in = z if b_pad == B else jnp.pad(z, ((0, b_pad - B), (0, 0)))
    grid = (b_pad // tm,)

    const2 = lambda i: (0, 0)
    const3 = lambda i: (0, 0, 0)

    inputs = [z_in, w_in, b_in]
    in_specs = [
        pl.BlockSpec((tm, in_features), lambda i: (i, 0)),   # streamed per tile
        pl.BlockSpec(w_in.shape, const2),                    # VMEM-resident
        pl.BlockSpec(b_in.shape, const2),
    ]
    if n_stacked > 0:
        inputs += [w_hidden, b_hidden]
        in_specs += [
            pl.BlockSpec(w_hidden.shape, const3),
            pl.BlockSpec(b_hidden.shape, const3),
        ]
    inputs += [w_out, b_out]
    in_specs += [pl.BlockSpec(w_out.shape, const2),
                 pl.BlockSpec(b_out.shape, const2)]

    # Advisory cost estimate so XLA schedules surrounding ops sensibly.
    dims = [in_features] + [H] * num_hidden_layers + [out_dim]
    flops = 2 * b_pad * sum(a * b for a, b in zip(dims[:-1], dims[1:]))
    param_bytes = sum(int(a.size) * a.dtype.itemsize for a in inputs[1:])
    bytes_accessed = (int(z_in.size) * z_in.dtype.itemsize + param_bytes
                      + b_pad * out_dim * z.dtype.itemsize)

    fused = pl.pallas_call(
        _make_mapping_kernel(num_hidden_layers),
        grid=grid,
        in_specs=in_specs,
        out_specs=pl.BlockSpec((tm, out_dim), lambda i: (i, 0)),
        out_shape=jax.ShapeDtypeStruct((b_pad, out_dim), z.dtype),
        compiler_params=pltpu.CompilerParams(
            dimension_semantics=("parallel",)),
        cost_estimate=pl.CostEstimate(
            flops=flops, transcendentals=0, bytes_accessed=bytes_accessed),
    )(*inputs)

    if b_pad != B:
        fused = fused[:B]
    half = out_dim // 2
    # Free layout plumbing in XLA: split the lane-dense slab outside the kernel.
    return fused[:, :half], fused[:, half:]


def init_params(key, in_features, map_hidden_layers, map_hidden_dim,
                map_output_dim, dtype=jnp.float32):
    """Mirror of the PyTorch __init__:
       - kaiming_normal_(a=0.2, mode='fan_in', nonlinearity='leaky_relu'),
       - default PyTorch uniform bias init,
       - final layer weight scaled by 0.25.
       Weights are stored transposed as [in, out]; hidden layers are stacked."""
    dims = [in_features] + [map_hidden_dim] * map_hidden_layers + [map_output_dim]
    gain = math.sqrt(2.0 / (1.0 + 0.2 ** 2))  # leaky_relu gain, a=0.2
    ws, bs = [], []
    for li in range(len(dims) - 1):
        fan_in, fan_out = dims[li], dims[li + 1]
        key, wk, bk = jax.random.split(key, 3)
        std = gain / math.sqrt(fan_in)
        w = std * jax.random.normal(wk, (fan_in, fan_out), jnp.float32)
        bound = 1.0 / math.sqrt(fan_in)
        b = jax.random.uniform(bk, (1, fan_out), jnp.float32, -bound, bound)
        if li == len(dims) - 2:
            w = w * 0.25  # self.network[-1].weight *= 0.25
        ws.append(w.astype(dtype))
        bs.append(b.astype(dtype))

    w_in, b_in = ws[0], bs[0]
    if map_hidden_layers > 1:
        w_hidden = jnp.stack(ws[1:map_hidden_layers])   # [Lh, H, H]
        b_hidden = jnp.stack(bs[1:map_hidden_layers])   # [Lh, 1, H]
    else:
        w_hidden = b_hidden = None
    w_out, b_out = ws[-1], bs[-1]
    return (w_in, b_in, w_hidden, b_hidden, w_out, b_out)


def reference_forward(z, params):
    """Pure-JAX reference (f32, highest matmul precision) for correctness."""
    w_in, b_in, w_hidden, b_hidden, w_out, b_out = params
    hi = jax.lax.Precision.HIGHEST
    x = jnp.dot(z.astype(jnp.float32), w_in.astype(jnp.float32),
                precision=hi) + b_in.astype(jnp.float32)
    x = jnp.where(x > 0, x, 0.2 * x)
    if w_hidden is not None:
        for li in range(w_hidden.shape[0]):
            x = jnp.dot(x, w_hidden[li].astype(jnp.float32),
                        precision=hi) + b_hidden[li].astype(jnp.float32)
            x = jnp.where(x > 0, x, 0.2 * x)
    x = jnp.dot(x, w_out.astype(jnp.float32),
                precision=hi) + b_out.astype(jnp.float32)
    half = w_out.shape[1] // 2
    return x[:, :half].astype(z.dtype), x[:, half:].astype(z.dtype)


if __name__ == "__main__":
    # Small deterministic shapes; block_m=16 gives a 2-step batch-tiled grid.
    batch = 32
    in_features = 16
    map_hidden_layers = 3
    map_hidden_dim = 32
    map_output_dim = 64

    key = jax.random.PRNGKey(0)
    key, zk = jax.random.split(key)
    z = jax.random.normal(zk, (batch, in_features), jnp.float32)

    params = init_params(key, in_features, map_hidden_layers,
                         map_hidden_dim, map_output_dim)

    freq, phase = custom_mapping_network_forward(z, params, block_m=16)
    freq = jax.block_until_ready(freq)
    phase = jax.block_until_ready(phase)

    ref_freq, ref_phase = reference_forward(z, params)
    assert freq.shape == (batch, map_output_dim // 2)
    assert phase.shape == (batch, map_output_dim // 2)
    assert jnp.allclose(freq, ref_freq, atol=1e-4, rtol=1e-4)
    assert jnp.allclose(phase, ref_phase, atol=1e-4, rtol=1e-4)

    print("KERNEL_OK")
</pallas_src>

<mosaic_0001>
module attributes {stable_mosaic.version = 11 : i64} {
  func.func @kernel(%arg0: i32, %arg1: memref<16x16xf32, #tpu.memory_space<vmem>>, %arg2: memref<16x32xf32, #tpu.memory_space<vmem>>, %arg3: memref<1x32xf32, #tpu.memory_space<vmem>>, %arg4: memref<2x32x32xf32, #tpu.memory_space<vmem>>, %arg5: memref<2x1x32xf32, #tpu.memory_space<vmem>>, %arg6: memref<32x64xf32, #tpu.memory_space<vmem>>, %arg7: memref<1x64xf32, #tpu.memory_space<vmem>>, %arg8: memref<16x64xf32, #tpu.memory_space<vmem>>) attributes {dimension_semantics = [#tpu.dimension_semantics<parallel>], iteration_bounds = array<i64: 2>, scalar_prefetch = 0 : i64, scratch_operands = 0 : i64, tpu.core_type = #tpu.core_type<tc>, window_params = [{transform_indices = @transform_0, window_bounds = array<i64: 16, 16>}, {pipeline_mode = #tpu.pipeline_mode<synchronous>, transform_indices = @transform_1, window_bounds = array<i64: 16, 32>}, {pipeline_mode = #tpu.pipeline_mode<synchronous>, transform_indices = @transform_2, window_bounds = array<i64: 1, 32>}, {pipeline_mode = #tpu.pipeline_mode<synchronous>, transform_indices = @transform_3, window_bounds = array<i64: 2, 32, 32>}, {pipeline_mode = #tpu.pipeline_mode<synchronous>, transform_indices = @transform_4, window_bounds = array<i64: 2, 1, 32>}, {pipeline_mode = #tpu.pipeline_mode<synchronous>, transform_indices = @transform_5, window_bounds = array<i64: 32, 64>}, {pipeline_mode = #tpu.pipeline_mode<synchronous>, transform_indices = @transform_6, window_bounds = array<i64: 1, 64>}, {transform_indices = @transform_7, window_bounds = array<i64: 16, 64>}]} {
    %c0 = arith.constant 0 : index
    %c0_0 = arith.constant 0 : index
    %0 = vector.load %arg1[%c0, %c0_0] : memref<16x16xf32, #tpu.memory_space<vmem>>, vector<16x16xf32>
    %c0_1 = arith.constant 0 : index
    %c0_2 = arith.constant 0 : index
    %1 = vector.load %arg2[%c0_1, %c0_2] : memref<16x32xf32, #tpu.memory_space<vmem>>, vector<16x32xf32>
    %cst = arith.constant dense<0.000000e+00> : vector<16x32xf32>
    %2 = tpu.matmul %0, %1, %cst {dimension_numbers = #tpu.dot_dimension_numbers<[1], [0], [0], [1], [0, 0, 1, 1], [], []>} : vector<16x16xf32>, vector<16x32xf32>, vector<16x32xf32> -> vector<16x32xf32>
    %c0_3 = arith.constant 0 : index
    %c0_4 = arith.constant 0 : index
    %3 = vector.load %arg3[%c0_3, %c0_4] : memref<1x32xf32, #tpu.memory_space<vmem>>, vector<1x32xf32>
    %4 = vector.broadcast %3 : vector<1x32xf32> to vector<16x32xf32>
    %5 = arith.addf %2, %4 : vector<16x32xf32>
    %cst_5 = arith.constant 2.000000e-01 : f32
    %6 = vector.broadcast %cst_5 : f32 to vector<16x32xf32>
    %7 = arith.mulf %6, %5 : vector<16x32xf32>
    %8 = arith.maximumf %5, %7 : vector<16x32xf32>
    %c0_6 = arith.constant 0 : index
    %c0_7 = arith.constant 0 : index
    %c0_8 = arith.constant 0 : index
    %9 = vector.load %arg4[%c0_6, %c0_7, %c0_8] : memref<2x32x32xf32, #tpu.memory_space<vmem>>, vector<1x32x32xf32>
    %10 = vector.shape_cast %9 : vector<1x32x32xf32> to vector<32x32xf32>
    %c0_9 = arith.constant 0 : index
    %c0_10 = arith.constant 0 : index
    %c0_11 = arith.constant 0 : index
    %11 = vector.load %arg5[%c0_9, %c0_10, %c0_11] : memref<2x1x32xf32, #tpu.memory_space<vmem>>, vector<1x1x32xf32>
    %12 = vector.shape_cast %11 : vector<1x1x32xf32> to vector<1x32xf32>
    %cst_12 = arith.constant dense<0.000000e+00> : vector<16x32xf32>
    %13 = tpu.matmul %8, %10, %cst_12 {dimension_numbers = #tpu.dot_dimension_numbers<[1], [0], [0], [1], [0, 0, 1, 1], [], []>} : vector<16x32xf32>, vector<32x32xf32>, vector<16x32xf32> -> vector<16x32xf32>
    %14 = vector.broadcast %12 : vector<1x32xf32> to vector<16x32xf32>
    %15 = arith.addf %13, %14 : vector<16x32xf32>
    %cst_13 = arith.constant 2.000000e-01 : f32
    %16 = vector.broadcast %cst_13 : f32 to vector<16x32xf32>
    %17 = arith.mulf %16, %15 : vector<16x32xf32>
    %18 = arith.maximumf %15, %17 : vector<16x32xf32>
    %c1 = arith.constant 1 : index
    %c0_14 = arith.constant 0 : index
    %c0_15 = arith.constant 0 : index
    %19 = vector.load %arg4[%c1, %c0_14, %c0_15] : memref<2x32x32xf32, #tpu.memory_space<vmem>>, vector<1x32x32xf32>
    %20 = vector.shape_cast %19 : vector<1x32x32xf32> to vector<32x32xf32>
    %c1_16 = arith.constant 1 : index
    %c0_17 = arith.constant 0 : index
    %c0_18 = arith.constant 0 : index
    %21 = vector.load %arg5[%c1_16, %c0_17, %c0_18] : memref<2x1x32xf32, #tpu.memory_space<vmem>>, vector<1x1x32xf32>
    %22 = vector.shape_cast %21 : vector<1x1x32xf32> to vector<1x32xf32>
    %cst_19 = arith.constant dense<0.000000e+00> : vector<16x32xf32>
    %23 = tpu.matmul %18, %20, %cst_19 {dimension_numbers = #tpu.dot_dimension_numbers<[1], [0], [0], [1], [0, 0, 1, 1], [], []>} : vector<16x32xf32>, vector<32x32xf32>, vector<16x32xf32> -> vector<16x32xf32>
    %24 = vector.broadcast %22 : vector<1x32xf32> to vector<16x32xf32>
    %25 = arith.addf %23, %24 : vector<16x32xf32>
    %cst_20 = arith.constant 2.000000e-01 : f32
    %26 = vector.broadcast %cst_20 : f32 to vector<16x32xf32>
    %27 = arith.mulf %26, %25 : vector<16x32xf32>
    %28 = arith.maximumf %25, %27 : vector<16x32xf32>
    %c0_21 = arith.constant 0 : index
    %c0_22 = arith.constant 0 : index
    %29 = vector.load %arg6[%c0_21, %c0_22] : memref<32x64xf32, #tpu.memory_space<vmem>>, vector<32x64xf32>
    %cst_23 = arith.constant dense<0.000000e+00> : vector<16x64xf32>
    %30 = tpu.matmul %28, %29, %cst_23 {dimension_numbers = #tpu.dot_dimension_numbers<[1], [0], [0], [1], [0, 0, 1, 1], [], []>} : vector<16x32xf32>, vector<32x64xf32>, vector<16x64xf32> -> vector<16x64xf32>
    %c0_24 = arith.constant 0 : index
    %c0_25 = arith.constant 0 : index
    %31 = vector.load %arg7[%c0_24, %c0_25] : memref<1x64xf32, #tpu.memory_space<vmem>>, vector<1x64xf32>
    %32 = vector.broadcast %31 : vector<1x64xf32> to vector<16x64xf32>
    %33 = arith.addf %30, %32 : vector<16x64xf32>
    %c0_26 = arith.constant 0 : index
    %c0_27 = arith.constant 0 : index
    %34 = vector.load %arg8[%c0_26, %c0_27] : memref<16x64xf32, #tpu.memory_space<vmem>>, vector<16x64xf32>
    tpu.vector_store %arg8[%c0_26, %c0_27], %33 {strides = array<i32>} : memref<16x64xf32, #tpu.memory_space<vmem>>, vector<16x64xf32>,
    return
  }
  func.func @transform_0(%arg0: i32) -> (i32, i32) {
    %c0_i32 = arith.constant 0 : i32
    %c0_i32_0 = arith.constant 0 : i32
    return %arg0, %c0_i32 : i32, i32
  }
  func.func @transform_1(%arg0: i32) -> (i32, i32) {
    %c0_i32 = arith.constant 0 : i32
    %c0_i32_0 = arith.constant 0 : i32
    %c0_i32_1 = arith.constant 0 : i32
    return %c0_i32, %c0_i32_0 : i32, i32
  }
  func.func @transform_2(%arg0: i32) -> (i32, i32) {
    %c0_i32 = arith.constant 0 : i32
    %c0_i32_0 = arith.constant 0 : i32
    %c0_i32_1 = arith.constant 0 : i32
    return %c0_i32, %c0_i32_0 : i32, i32
  }
  func.func @transform_3(%arg0: i32) -> (i32, i32, i32) {
    %c0_i32 = arith.constant 0 : i32
    %c0_i32_0 = arith.constant 0 : i32
    %c0_i32_1 = arith.constant 0 : i32
    %c0_i32_2 = arith.constant 0 : i32
    return %c0_i32, %c0_i32_0, %c0_i32_1 : i32, i32, i32
  }
  func.func @transform_4(%arg0: i32) -> (i32, i32, i32) {
    %c0_i32 = arith.constant 0 : i32
    %c0_i32_0 = arith.constant 0 : i32
    %c0_i32_1 = arith.constant 0 : i32
    %c0_i32_2 = arith.constant 0 : i32
    return %c0_i32, %c0_i32_0, %c0_i32_1 : i32, i32, i32
  }
  func.func @transform_5(%arg0: i32) -> (i32, i32) {
    %c0_i32 = arith.constant 0 : i32
    %c0_i32_0 = arith.constant 0 : i32
    %c0_i32_1 = arith.constant 0 : i32
    return %c0_i32, %c0_i32_0 : i32, i32
  }
  func.func @transform_6(%arg0: i32) -> (i32, i32) {
    %c0_i32 = arith.constant 0 : i32
    %c0_i32_0 = arith.constant 0 : i32
    %c0_i32_1 = arith.constant 0 : i32
    return %c0_i32, %c0_i32_0 : i32, i32
  }
  func.func @transform_7(%arg0: i32) -> (i32, i32) {
    %c0_i32 = arith.constant 0 : i32
    %c0_i32_0 = arith.constant 0 : i32
    return %arg0, %c0_i32 : i32, i32
  }
}

</mosaic_0001>

<llo_original>
// kernel: tpu_custom_call.1
$region0: #{tpu_custom_call.1}
  #allocation0 [shape = 'u32[]', space=smem, size = 0x4, offset = 0x4, fixed_abs, tag = 'smem constant byte address 0x4 - core index']
  #allocation1 [shape = 'u32[144,128]{1,0:T(1,128)}', space=vmem, size = 0x12000, scoped, tag = 'internal scratch']
  %s0 = inlined_call_operand.vmem [shape: f32[32,16], index: 0, kind: input, shape index: {}]
  %s1 = inlined_call_operand.vmem [shape: f32[16,32], index: 1, kind: input, shape index: {}]
  %s2 = inlined_call_operand.vmem [shape: f32[1,32], index: 2, kind: input, shape index: {}]
  %s3 = inlined_call_operand.hbm [shape: f32[2,32,32], index: 3, kind: input, shape index: {}]
  %s4 = inlined_call_operand.vmem [shape: f32[2,1,32], index: 4, kind: input, shape index: {}]
  %s5 = inlined_call_operand.vmem [shape: f32[32,64], index: 5, kind: input, shape index: {}]
  %s6 = inlined_call_operand.vmem [shape: f32[1,64], index: 6, kind: input, shape index: {}]
  %s7 = inlined_call_operand.hbm [shape: f32[32,64], index: 7, kind: output, shape index: {}]
  %s8 = sld [smem:[#allocation0]]
  $region65: #{tpu_custom_call.1} parent=0
    _
  %s10 = ssub.s32 1, %s8
  %s11 = scalar_select 0, %s10, %s8
  $region1: #{tpu_custom_call.1} parent=0
    #allocation2 [shape = 'u8[32768]{0}', space=vmem, size = 0x8000, scoped, tag = 'input window, operand 3, single buffered']
    #allocation3 [shape = 's32[2]{0}', space=sflag, size = 0x8, scoped, tag = 'scoped memory for tpu_custom_call.1']
    #allocation4 [shape = 's32[2]{0}', space=sflag, size = 0x8, scoped, tag = 'scoped memory for tpu_custom_call.1']
    #allocation5 [shape = 'u8[16384]{0}', space=vmem, size = 0x4000, scoped, tag = 'output window, operand 0']
    %12 = vsyncpa [#allocation3], 0
    %13 = vsyncpa [#allocation4], 0
    %s14 = scalar_lea.sflag [#allocation4], 1
    %15 = vsyncpa %s14, 0
    loop: start=0, step=1, limit=4
    $region2: #{tpu_custom_call.1} parent=1 // loop_pre_header
      _
    $region3: #{tpu_custom_call.1} parent=1 // loop_header
      %s17 = sphi 0, %s21
      %p18 = scmp.ge.s32.totalorder %s17, 4
      %s27 = sphi 0, %s29
      %s30 = sphi 0, %s27
      %s31 = sphi 0, %s30
      %s47 = sphi 0, %s31
      %s51 = sphi 0, %s51
      %s53 = sphi 0, %s51
      %s54 = sphi 0, %s53
      %s68 = sphi 0, %s54
      %s72 = sphi 0, %s72
      %s74 = sphi 0, %s72
      %s75 = sphi 0, %s74
      %s89 = sphi 0, %s75
      %s93 = sphi 0, %s93
      %s95 = sphi 0, %s93
      %s96 = sphi 0, %s95
      %s110 = sphi 0, %s96
      %s114 = sphi 0, %s114
      %s116 = sphi 0, %s114
      %s117 = sphi 0, %s116
      %s131 = sphi 0, %s117
      %s135 = sphi 0, %s135
      %s137 = sphi 0, %s135
      %s138 = sphi 0, %s137
      %s152 = sphi 0, %s138
      %s156 = sphi 0, %s156
      %s158 = sphi 0, %s156
      %s159 = sphi 0, %s158
      %s173 = sphi 0, %s159
      %s179 = sphi 0, %s181
      %s182 = sphi 0, %s179
      %s183 = sphi 0, %s182
      %s199 = sphi 0, %s183
    $region4: #{tpu_custom_call.1} parent=1 // loop_header_branch
      %20 = sbr.rel (%p18) target = $region8
    $region5: #{tpu_custom_call.1} parent=1 // loop_body
      %s22 = ssub.s32 %s17, 1
      %s23 = ssub.s32 %s17, 2
      %s24 = sadd.s32 %s17, 1
      %s25 = ssub.s32 %s17, %s24
      %p26 = scmp.eq.s32.totalorder %s25, 0
      %s28 = sadd.s32 %s27, 1
      %s29 = scalar_select %p26, %s27, %s28
      %p32 = pneg %p26
      %p33 = scmp.eq.s32.totalorder %s17, 1
      %p34 = por %p32, %p33
      %p35 = scmp.ne.s32.totalorder %s27, %s30
      %p36 = scmp.eq.s32.totalorder %s17, 0
      %p37 = por %p35, %p36
      %p38 = scmp.ne.s32.totalorder %s27, %s30
      %p39 = scmp.eq.s32.totalorder %s22, 1
      %p40 = por %p38, %p39
      %p41 = scmp.ne.s32.totalorder %s30, %s31
      %p42 = scmp.eq.s32.totalorder %s22, 0
      %p43 = por %p41, %p42
      %p44 = scmp.ne.s32.totalorder %s30, %s31
      %p45 = scmp.eq.s32.totalorder %s23, 1
      %p46 = por %p44, %p45
      %p48 = scmp.ne.s32.totalorder %s31, %s47
      %p49 = scmp.eq.s32.totalorder %s23, 0
      %p50 = por %p48, %p49
      %s52 = sadd.s32 %s51, 1
      %p55 = scmp.eq.s32.totalorder %s17, 1
      %p56 = scmp.ne.s32.totalorder %s51, %s53
      %p57 = scmp.eq.s32.totalorder %s17, 0
      %p58 = por %p56, %p57
      %p59 = scmp.ne.s32.totalorder %s51, %s53
      %p60 = scmp.eq.s32.totalorder %s22, 1
      %p61 = por %p59, %p60
      %p62 = scmp.ne.s32.totalorder %s53, %s54
      %p63 = scmp.eq.s32.totalorder %s22, 0
      %p64 = por %p62, %p63
      %p65 = scmp.ne.s32.totalorder %s53, %s54
      %p66 = scmp.eq.s32.totalorder %s23, 1
      %p67 = por %p65, %p66
      %p69 = scmp.ne.s32.totalorder %s54, %s68
      %p70 = scmp.eq.s32.totalorder %s23, 0
      %p71 = por %p69, %p70
      %s73 = sadd.s32 %s72, 1
      %p76 = scmp.eq.s32.totalorder %s17, 1
      %p77 = scmp.ne.s32.totalorder %s72, %s74
      %p78 = scmp.eq.s32.totalorder %s17, 0
      %p79 = por %p77, %p78
      %p80 = scmp.ne.s32.totalorder %s72, %s74
      %p81 = scmp.eq.s32.totalorder %s22, 1
      %p82 = por %p80, %p81
      %p83 = scmp.ne.s32.totalorder %s74, %s75
      %p84 = scmp.eq.s32.totalorder %s22, 0
      %p85 = por %p83, %p84
      %p86 = scmp.ne.s32.totalorder %s74, %s75
      %p87 = scmp.eq.s32.totalorder %s23, 1
      %p88 = por %p86, %p87
      %p90 = scmp.ne.s32.totalorder %s75, %s89
      %p91 = scmp.eq.s32.totalorder %s23, 0
      %p92 = por %p90, %p91
      %s94 = sadd.s32 %s93, 1
      %p97 = scmp.eq.s32.totalorder %s17, 1
      %p98 = scmp.ne.s32.totalorder %s93, %s95
      %p99 = scmp.eq.s32.totalorder %s17, 0
      %p100 = por %p98, %p99
      %p101 = scmp.ne.s32.totalorder %s93, %s95
      %p102 = scmp.eq.s32.totalorder %s22, 1
      %p103 = por %p101, %p102
      %p104 = scmp.ne.s32.totalorder %s95, %s96
      %p105 = scmp.eq.s32.totalorder %s22, 0
      %p106 = por %p104, %p105
      %p107 = scmp.ne.s32.totalorder %s95, %s96
      %p108 = scmp.eq.s32.totalorder %s23, 1
      %p109 = por %p107, %p108
      %p111 = scmp.ne.s32.totalorder %s96, %s110
      %p112 = scmp.eq.s32.totalorder %s23, 0
      %p113 = por %p111, %p112
      %s115 = sadd.s32 %s114, 1
      %p118 = scmp.eq.s32.totalorder %s17, 1
      %p119 = scmp.ne.s32.totalorder %s114, %s116
      %p120 = scmp.eq.s32.totalorder %s17, 0
      %p121 = por %p119, %p120
      %p122 = scmp.ne.s32.totalorder %s114, %s116
      %p123 = scmp.eq.s32.totalorder %s22, 1
      %p124 = por %p122, %p123
      %p125 = scmp.ne.s32.totalorder %s116, %s117
      %p126 = scmp.eq.s32.totalorder %s22, 0
      %p127 = por %p125, %p126
      %p128 = scmp.ne.s32.totalorder %s116, %s117
      %p129 = scmp.eq.s32.totalorder %s23, 1
      %p130 = por %p128, %p129
      %p132 = scmp.ne.s32.totalorder %s117, %s131
      %p133 = scmp.eq.s32.totalorder %s23, 0
      %p134 = por %p132, %p133
      %s136 = sadd.s32 %s135, 1
      %p139 = scmp.eq.s32.totalorder %s17, 1
      %p140 = scmp.ne.s32.totalorder %s135, %s137
      %p141 = scmp.eq.s32.totalorder %s17, 0
      %p142 = por %p140, %p141
      %p143 = scmp.ne.s32.totalorder %s135, %s137
      %p144 = scmp.eq.s32.totalorder %s22, 1
      %p145 = por %p143, %p144
      %p146 = scmp.ne.s32.totalorder %s137, %s138
      %p147 = scmp.eq.s32.totalorder %s22, 0
      %p148 = por %p146, %p147
      %p149 = scmp.ne.s32.totalorder %s137, %s138
      %p150 = scmp.eq.s32.totalorder %s23, 1
      %p151 = por %p149, %p150
      %p153 = scmp.ne.s32.totalorder %s138, %s152
      %p154 = scmp.eq.s32.totalorder %s23, 0
      %p155 = por %p153, %p154
      %s157 = sadd.s32 %s156, 1
      %p160 = scmp.eq.s32.totalorder %s17, 1
      %p161 = scmp.ne.s32.totalorder %s156, %s158
      %p162 = scmp.eq.s32.totalorder %s17, 0
      %p163 = por %p161, %p162
      %p164 = scmp.ne.s32.totalorder %s156, %s158
      %p165 = scmp.eq.s32.totalorder %s22, 1
      %p166 = por %p164, %p165
      %p167 = scmp.ne.s32.totalorder %s158, %s159
      %p168 = scmp.eq.s32.totalorder %s22, 0
      %p169 = por %p167, %p168
      %p170 = scmp.ne.s32.totalorder %s158, %s159
      %p171 = scmp.eq.s32.totalorder %s23, 1
      %p172 = por %p170, %p171
      %p174 = scmp.ne.s32.totalorder %s159, %s173
      %p175 = scmp.eq.s32.totalorder %s23, 0
      %p176 = por %p174, %p175
      %s177 = ssub.s32 %s17, %s24
      %p178 = scmp.eq.s32.totalorder %s177, 0
      %s180 = sadd.s32 %s179, 1
      %s181 = scalar_select %p178, %s179, %s180
      %p184 = pneg %p178
      %p185 = scmp.eq.s32.totalorder %s17, 1
      %p186 = por %p184, %p185
      %p187 = scmp.ne.s32.totalorder %s179, %s182
      %p188 = scmp.eq.s32.totalorder %s17, 0
      %p189 = por %p187, %p188
      %p190 = scmp.ne.s32.totalorder %s179, %s182
      %p191 = scmp.eq.s32.totalorder %s22, 1
      %p192 = por %p190, %p191
      %p193 = scmp.ne.s32.totalorder %s182, %s183
      %p194 = scmp.eq.s32.totalorder %s22, 0
      %p195 = por %p193, %p194
      %p196 = scmp.ne.s32.totalorder %s182, %s183
      %p197 = scmp.eq.s32.totalorder %s23, 1
      %p198 = por %p196, %p197
      %p200 = scmp.ne.s32.totalorder %s183, %s199
      %p201 = scmp.eq.s32.totalorder %s23, 0
      %p202 = por %p200, %p201
      %p203 = scmp.le.s32.totalorder 1, %s17
      %p204 = scmp.lt.s32.totalorder %s17, 3
      %p205 = pnand %p203, %p204
      %p206 = pneg %p205
      // Predicated region
      $region9: #{tpu_custom_call.1} parent=5 // pred_check
        _
      $region10: #{tpu_custom_call.1} parent=5 // pred_check_branch
        %208 = sbr.rel (%p205) target = $region12
      $region11: #{tpu_custom_call.1} parent=5 // pred_region
        %s209 = ssub.s32 %s17, 1
        // Predicated region
        $region13: #{tpu_custom_call.1} parent=11 // pred_check
          %p210 = pneg %p64
        $region14: #{tpu_custom_call.1} parent=11 // pred_check_branch
          %212 = sbr.rel (%p210) target = $region16
        $region15: #{tpu_custom_call.1} parent=11 // pred_region
          _
        $region16: #{tpu_custom_call.1} parent=11 // pred_fallthru
          _
        // Predicated region
        $region17: #{tpu_custom_call.1} parent=11 // pred_check
          %p213 = pneg %p85
        $region18: #{tpu_custom_call.1} parent=11 // pred_check_branch
          %215 = sbr.rel (%p213) target = $region20
        $region19: #{tpu_custom_call.1} parent=11 // pred_region
          _
        $region20: #{tpu_custom_call.1} parent=11 // pred_fallthru
          _
        // Predicated region
        $region21: #{tpu_custom_call.1} parent=11 // pred_check
          %p216 = pneg %p106
        $region22: #{tpu_custom_call.1} parent=11 // pred_check_branch
          %218 = sbr.rel (%p216) target = $region24
        $region23: #{tpu_custom_call.1} parent=11 // pred_region
          %s220 = ssub.s32 1024, 1024
          %221 = vsyncadd [#allocation3], %s220
          %s222 = sshll.u32 [#allocation2], 4
          %s223 = int_to_ptr.vmem [resolvable:$true] %s222
          %228 = dma.hbm_to_vmem [thread:$0]  %s3, 1024, %s223, [#allocation3], 128, 128, 8
        $region24: #{tpu_custom_call.1} parent=11 // pred_fallthru
          _
        // Predicated region
        $region25: #{tpu_custom_call.1} parent=11 // pred_check
          %p229 = pneg %p127
        $region26: #{tpu_custom_call.1} parent=11 // pred_check_branch
          %231 = sbr.rel (%p229) target = $region28
        $region27: #{tpu_custom_call.1} parent=11 // pred_region
          _
        $region28: #{tpu_custom_call.1} parent=11 // pred_fallthru
          _
        // Predicated region
        $region29: #{tpu_custom_call.1} parent=11 // pred_check
          %p232 = pneg %p148
        $region30: #{tpu_custom_call.1} parent=11 // pred_check_branch
          %234 = sbr.rel (%p232) target = $region32
        $region31: #{tpu_custom_call.1} parent=11 // pred_region
          _
        $region32: #{tpu_custom_call.1} parent=11 // pred_fallthru
          _
        // Predicated region
        $region33: #{tpu_custom_call.1} parent=11 // pred_check
          %p235 = pneg %p169
        $region34: #{tpu_custom_call.1} parent=11 // pred_check_branch
          %237 = sbr.rel (%p235) target = $region36
        $region35: #{tpu_custom_call.1} parent=11 // pred_region
          _
        $region36: #{tpu_custom_call.1} parent=11 // pred_fallthru
          _
      $region12: #{tpu_custom_call.1} parent=5 // pred_fallthru
        _
      %p238 = scmp.lt.s32.totalorder %s17, 2
      // Predicated region
      $region37: #{tpu_custom_call.1} parent=5 // pred_check
        %p239 = pneg %p238
      $region38: #{tpu_custom_call.1} parent=5 // pred_check_branch
        %241 = sbr.rel (%p239) target = $region40
      $region39: #{tpu_custom_call.1} parent=5 // pred_region
        // Predicated region
        $region41: #{tpu_custom_call.1} parent=39 // pred_check
          %p242 = pneg %p37
        $region42: #{tpu_custom_call.1} parent=39 // pred_check_branch
          %244 = sbr.rel (%p242) target = $region44
        $region43: #{tpu_custom_call.1} parent=39 // pred_region
          %s245 = smul.u32 2, %s17
          %p246 = scmp.lt.s32.totalorder %s245, 3
          %s247 = scalar_select %p246, %s245, 3
          %s248 = smul.addr %s247, 8
          %s249 = scalar_lea.vmem %s0, %s248
          %s250 = smul.u32 2, %s17
        $region44: #{tpu_custom_call.1} parent=39 // pred_fallthru
          _
      $region40: #{tpu_custom_call.1} parent=5 // pred_fallthru
        _
      %p251 = scmp.le.s32.totalorder 1, %s17
      %p252 = scmp.lt.s32.totalorder %s17, 3
      %p253 = pnand %p251, %p252
      %p254 = pneg %p253
      // Predicated region
      $region45: #{tpu_custom_call.1} parent=5 // pred_check
        _
      $region46: #{tpu_custom_call.1} parent=5 // pred_check_branch
        %256 = sbr.rel (%p253) target = $region48
      $region47: #{tpu_custom_call.1} parent=5 // pred_region
        %s257 = ssub.s32 %s17, 1
        // Predicated region
        $region49: #{tpu_custom_call.1} parent=47 // pred_check
          %p258 = pneg %p106
        $region50: #{tpu_custom_call.1} parent=47 // pred_check_branch
          %260 = sbr.rel (%p258) target = $region52
        $region51: #{tpu_custom_call.1} parent=47 // pred_region
          %261 = dma.done [#allocation3], 1024
        $region52: #{tpu_custom_call.1} parent=47 // pred_fallthru
          _
        %s262 = smul.u32 2, %s22
        %p263 = scmp.lt.s32.totalorder %s262, 3
        %s264 = scalar_select %p263, %s262, 3
        %s265 = smul.addr %s264, 8
        %s266 = scalar_lea.vmem %s0, %s265
        %p267 = pneg %p43
        %p268 = pneg %p40
        %p269 = pneg %p64
        %p270 = pneg %p61
        %p271 = pneg %p85
        %p272 = pneg %p82
        %p273 = pneg %p106
        %p274 = pneg %p103
        %p275 = pneg %p127
        %p276 = pneg %p124
        %p277 = pneg %p148
        %p278 = pneg %p145
        %p279 = pneg %p169
        %p280 = pneg %p166
        %p281 = pneg %p195
        %p282 = pneg %p192
        %s283 = sand.u32 %s182, 1
        %s284 = scalar_lea.sflag [#allocation4], %s283
        %s285 = sand.u32 %s182, 1
        %s286 = smul.addr %s285, 16
        %s287 = scalar_lea.vmem [#allocation5], %s286
        %s288 = smul.u32 2, %s22
        %p289 = scmp.lt.s32.totalorder %s288, 3
        %s290 = scalar_select %p289, %s288, 3
        %s291 = smul.addr %s290, 8
        %s292 = scalar_lea.vmem %s0, %s291
        %s293 = smul.u32 2, %s22
        %s294 = smul.u32 2, %s22
        %v295 = vld [vmem:[%s292] sm:$0xff]
        %v296 = vld [vmem:[%s292 + $0x8] sm:$0xff]
        %v297 = vld [vmem:[%s1] sm:$0xff]
        %v298 = vld [vmem:[%s1 + $0x8] sm:$0xff]
        %v299 = vld [vmem:[%s2] sm:$0x1]
        %v301 = vlaneseq
        %v302 = vshrl.u32 %v301, 7
        %v303 = vsub.s32 0, %v302
        %v304 = vrot.slane %v299, %v303
        %vm306 = vcmask 130048
        %v308 = vsel %vm306, %v295, 0
        %v311 = vsel %vm306, %v296, 0
        %313 = vmatprep.subr.mxu0 0.0
        %314 = vmatpush1.msra.mxu0 %v297
        %315 = vmatprep.subr.mxu0 0.0
        %316 = vmatpush1.msra.mxu0 %v298
        %317 = vmatprep.subr.mxu0 0.0
        %318 = vmatpush1.msra.mxu0 0.0
        %319 = vmatprep.subr.mxu0 0.0
        %320 = vmatpush1.msra.mxu0 0.0
        %321 = vmatprep.subr.mxu0 0.0
        %322 = vmatpush1.msra.mxu0 0.0
        %323 = vmatprep.subr.mxu0 0.0
        %324 = vmatpush1.msra.mxu0 0.0
        %325 = vmatprep.subr.mxu0 0.0
        %326 = vmatpush1.msra.mxu0 0.0
        %327 = vmatprep.subr.mxu0 0.0
        %328 = vmatpush1.msra.mxu0 0.0
        %329 = vmatprep.subr.mxu0 0.0
        %330 = vmatpush1.msra.mxu0 0.0
        %331 = vmatprep.subr.mxu0 0.0
        %332 = vmatpush1.msra.mxu0 0.0
        %333 = vmatprep.subr.mxu0 0.0
        %334 = vmatpush1.msra.mxu0 0.0
        %335 = vmatprep.subr.mxu0 0.0
        %336 = vmatpush1.msra.mxu0 0.0
        %337 = vmatprep.subr.mxu0 0.0
        %338 = vmatpush1.msra.mxu0 0.0
        %339 = vmatprep.subr.mxu0 0.0
        %340 = vmatpush1.msra.mxu0 0.0
        %341 = vmatprep.subr.mxu0 0.0
        %342 = vmatpush1.msra.mxu0 0.0
        %343 = vmatprep.subr.mxu0 0.0
        %344 = vmatpush1.msra.mxu0 0.0
        %345 = vmatprep.subr.mxu0 0.0
        %346 = vmatpush1.msra.mxu0 0.0
        %347 = vmatprep.subr.mxu0 0.0
        %348 = vmatpush1.msra.mxu0 0.0
        %349 = vmatprep.subr.mxu0 0.0
        %350 = vmatpush1.msra.mxu0 0.0
        %351 = vmatprep.subr.mxu0 0.0
        %352 = vmatpush1.msra.mxu0 0.0
        %353 = vmatprep.subr.mxu0 0.0
        %354 = vmatpush1.msra.mxu0 0.0
        %355 = vmatprep.subr.mxu0 0.0
        %356 = vmatpush1.msra.mxu0 0.0
        %357 = vmatprep.subr.mxu0 0.0
        %358 = vmatpush1.msra.mxu0 0.0
        %359 = vmatprep.subr.mxu0 0.0
        %360 = vmatpush1.msra.mxu0 0.0
        %361 = vmatprep.subr.mxu0 0.0
        %362 = vmatpush1.msra.mxu0 0.0
        %363 = vmatprep.subr.mxu0 0.0
        %364 = vmatpush1.msra.mxu0 0.0
        %365 = vmatprep.subr.mxu0 0.0
        %366 = vmatpush1.msra.mxu0 0.0
        %367 = vmatprep.subr.mxu0 0.0
        %368 = vmatpush1.msra.mxu0 0.0
        %369 = vmatprep.subr.mxu0 0.0
        %370 = vmatpush1.msra.mxu0 0.0
        %371 = vmatprep.subr.mxu0 0.0
        %372 = vmatpush1.msra.mxu0 0.0
        %373 = vmatprep.subr.mxu0 0.0
        %374 = vmatpush1.msra.mxu0 0.0
        %375 = vmatprep.subr.mxu0 0.0
        %376 = vmatpush1.msra.mxu0 0.0
        %377 = vmatprep.mubr.f32.mxu0 0.0
        %378 = vmatmul.mubr.f32.gmra.mrb[0].mxu0 %v308
        %v379 = vpop.f32.mrb[0].mxu0
        %v380 = vadd.f32 %v304, %v379
        %v381 = vpop.f32.mrb[0].mxu0
        %382 = vmatprep.mubr.f32.mxu0 0.0
        %383 = vmatmul.mubr.f32.gmra.mrb[0].mxu0 %v311
        %v384 = vpop.f32.mrb[0].mxu0
        %v385 = vadd.f32 %v304, %v384
        %v386 = vpop.f32.mrb[0].mxu0
        %387 = vdwg.mxu0
        %v388 = vmul.f32 %v380, 0.2
        %v389 = vmul.f32 %v385, 0.2
        %v390 = vmax.f32 %v380, %v388
        %v391 = vmax.f32 %v385, %v389
        %v392 = vld [vmem:[#allocation2] sm:$0xff]
        %v393 = vld [vmem:[#allocation2 + $0x8] sm:$0xff]
        %v394 = vld [vmem:[#allocation2 + $0x10] sm:$0xff]
        %v395 = vld [vmem:[#allocation2 + $0x18] sm:$0xff]
        %v396 = vld [vmem:[%s4] sm:$0x1]
        %v398 = vlaneseq
        %v399 = vshrl.u32 %v398, 7
        %v400 = vsub.s32 0, %v399
        %v401 = vrot.slane %v396, %v400
        %vm403 = vcmask 261120
        %v405 = vsel %vm403, %v390, 0
        %v408 = vsel %vm403, %v391, 0
        %410 = vmatprep.subr.mxu0 0.0
        %411 = vmatpush1.msra.mxu0 %v392
        %412 = vmatprep.subr.mxu0 0.0
        %413 = vmatpush1.msra.mxu0 %v393
        %414 = vmatprep.subr.mxu0 0.0
        %415 = vmatpush1.msra.mxu0 %v394
        %416 = vmatprep.subr.mxu0 0.0
        %417 = vmatpush1.msra.mxu0 %v395
        %418 = vmatprep.subr.mxu0 0.0
        %419 = vmatpush1.msra.mxu0 0.0
        %420 = vmatprep.subr.mxu0 0.0
        %421 = vmatpush1.msra.mxu0 0.0
        %422 = vmatprep.subr.mxu0 0.0
        %423 = vmatpush1.msra.mxu0 0.0
        %424 = vmatprep.subr.mxu0 0.0
        %425 = vmatpush1.msra.mxu0 0.0
        %426 = vmatprep.subr.mxu0 0.0
        %427 = vmatpush1.msra.mxu0 0.0
        %428 = vmatprep.subr.mxu0 0.0
        %429 = vmatpush1.msra.mxu0 0.0
        %430 = vmatprep.subr.mxu0 0.0
        %431 = vmatpush1.msra.mxu0 0.0
        %432 = vmatprep.subr.mxu0 0.0
        %433 = vmatpush1.msra.mxu0 0.0
        %434 = vmatprep.subr.mxu0 0.0
        %435 = vmatpush1.msra.mxu0 0.0
        %436 = vmatprep.subr.mxu0 0.0
        %437 = vmatpush1.msra.mxu0 0.0
        %438 = vmatprep.subr.mxu0 0.0
        %439 = vmatpush1.msra.mxu0 0.0
        %440 = vmatprep.subr.mxu0 0.0
        %441 = vmatpush1.msra.mxu0 0.0
        %442 = vmatprep.subr.mxu0 0.0
        %443 = vmatpush1.msra.mxu0 0.0
        %444 = vmatprep.subr.mxu0 0.0
        %445 = vmatpush1.msra.mxu0 0.0
        %446 = vmatprep.subr.mxu0 0.0
        %447 = vmatpush1.msra.mxu0 0.0
        %448 = vmatprep.subr.mxu0 0.0
        %449 = vmatpush1.msra.mxu0 0.0
        %450 = vmatprep.subr.mxu0 0.0
        %451 = vmatpush1.msra.mxu0 0.0
        %452 = vmatprep.subr.mxu0 0.0
        %453 = vmatpush1.msra.mxu0 0.0
        %454 = vmatprep.subr.mxu0 0.0
        %455 = vmatpush1.msra.mxu0 0.0
        %456 = vmatprep.subr.mxu0 0.0
        %457 = vmatpush1.msra.mxu0 0.0
        %458 = vmatprep.subr.mxu0 0.0
        %459 = vmatpush1.msra.mxu0 0.0
        %460 = vmatprep.subr.mxu0 0.0
        %461 = vmatpush1.msra.mxu0 0.0
        %462 = vmatprep.subr.mxu0 0.0
        %463 = vmatpush1.msra.mxu0 0.0
        %464 = vmatprep.subr.mxu0 0.0
        %465 = vmatpush1.msra.mxu0 0.0
        %466 = vmatprep.subr.mxu0 0.0
        %467 = vmatpush1.msra.mxu0 0.0
        %468 = vmatprep.subr.mxu0 0.0
        %469 = vmatpush1.msra.mxu0 0.0
        %470 = vmatprep.subr.mxu0 0.0
        %471 = vmatpush1.msra.mxu0 0.0
        %472 = vmatprep.subr.mxu0 0.0
        %473 = vmatpush1.msra.mxu0 0.0
        %474 = vmatprep.mubr.f32.mxu0 0.0
        %475 = vmatmul.mubr.f32.gmra.mrb[0].mxu0 %v405
        %v476 = vpop.f32.mrb[0].mxu0
        %v477 = vadd.f32 %v401, %v476
        %v478 = vpop.f32.mrb[0].mxu0
        %479 = vmatprep.mubr.f32.mxu0 0.0
        %480 = vmatmul.mubr.f32.gmra.mrb[0].mxu0 %v408
        %v481 = vpop.f32.mrb[0].mxu0
        %v482 = vadd.f32 %v401, %v481
        %v483 = vpop.f32.mrb[0].mxu0
        %484 = vdwg.mxu0
        %v485 = vmul.f32 %v477, 0.2
        %v486 = vmul.f32 %v482, 0.2
        %v487 = vmax.f32 %v477, %v485
        %v488 = vmax.f32 %v482, %v486
        %s489 = scalar_lea.vmem [#allocation2], 32
        %v490 = vld [vmem:[%s489] sm:$0xff]
        %v491 = vld [vmem:[%s489 + $0x8] sm:$0xff]
        %v492 = vld [vmem:[%s489 + $0x10] sm:$0xff]
        %v493 = vld [vmem:[%s489 + $0x18] sm:$0xff]
        %s494 = scalar_lea.vmem %s4, 1
        %v495 = vld [vmem:[%s494] sm:$0x1]
        %v497 = vlaneseq
        %v498 = vshrl.u32 %v497, 7
        %v499 = vsub.s32 0, %v498
        %v500 = vrot.slane %v495, %v499
        %v503 = vsel %vm403, %v487, 0
        %v506 = vsel %vm403, %v488, 0
        %508 = vmatprep.subr.mxu0 0.0
        %509 = vmatpush1.msra.mxu0 %v490
        %510 = vmatprep.subr.mxu0 0.0
        %511 = vmatpush1.msra.mxu0 %v491
        %512 = vmatprep.subr.mxu0 0.0
        %513 = vmatpush1.msra.mxu0 %v492
        %514 = vmatprep.subr.mxu0 0.0
        %515 = vmatpush1.msra.mxu0 %v493
        %516 = vmatprep.subr.mxu0 0.0
        %517 = vmatpush1.msra.mxu0 0.0
        %518 = vmatprep.subr.mxu0 0.0
        %519 = vmatpush1.msra.mxu0 0.0
        %520 = vmatprep.subr.mxu0 0.0
        %521 = vmatpush1.msra.mxu0 0.0
        %522 = vmatprep.subr.mxu0 0.0
        %523 = vmatpush1.msra.mxu0 0.0
        %524 = vmatprep.subr.mxu0 0.0
        %525 = vmatpush1.msra.mxu0 0.0
        %526 = vmatprep.subr.mxu0 0.0
        %527 = vmatpush1.msra.mxu0 0.0
        %528 = vmatprep.subr.mxu0 0.0
        %529 = vmatpush1.msra.mxu0 0.0
        %530 = vmatprep.subr.mxu0 0.0
        %531 = vmatpush1.msra.mxu0 0.0
        %532 = vmatprep.subr.mxu0 0.0
        %533 = vmatpush1.msra.mxu0 0.0
        %534 = vmatprep.subr.mxu0 0.0
        %535 = vmatpush1.msra.mxu0 0.0
        %536 = vmatprep.subr.mxu0 0.0
        %537 = vmatpush1.msra.mxu0 0.0
        %538 = vmatprep.subr.mxu0 0.0
        %539 = vmatpush1.msra.mxu0 0.0
        %540 = vmatprep.subr.mxu0 0.0
        %541 = vmatpush1.msra.mxu0 0.0
        %542 = vmatprep.subr.mxu0 0.0
        %543 = vmatpush1.msra.mxu0 0.0
        %544 = vmatprep.subr.mxu0 0.0
        %545 = vmatpush1.msra.mxu0 0.0
        %546 = vmatprep.subr.mxu0 0.0
        %547 = vmatpush1.msra.mxu0 0.0
        %548 = vmatprep.subr.mxu0 0.0
        %549 = vmatpush1.msra.mxu0 0.0
        %550 = vmatprep.subr.mxu0 0.0
        %551 = vmatpush1.msra.mxu0 0.0
        %552 = vmatprep.subr.mxu0 0.0
        %553 = vmatpush1.msra.mxu0 0.0
        %554 = vmatprep.subr.mxu0 0.0
        %555 = vmatpush1.msra.mxu0 0.0
        %556 = vmatprep.subr.mxu0 0.0
        %557 = vmatpush1.msra.mxu0 0.0
        %558 = vmatprep.subr.mxu0 0.0
        %559 = vmatpush1.msra.mxu0 0.0
        %560 = vmatprep.subr.mxu0 0.0
        %561 = vmatpush1.msra.mxu0 0.0
        %562 = vmatprep.subr.mxu0 0.0
        %563 = vmatpush1.msra.mxu0 0.0
        %564 = vmatprep.subr.mxu0 0.0
        %565 = vmatpush1.msra.mxu0 0.0
        %566 = vmatprep.subr.mxu0 0.0
        %567 = vmatpush1.msra.mxu0 0.0
        %568 = vmatprep.subr.mxu0 0.0
        %569 = vmatpush1.msra.mxu0 0.0
        %570 = vmatprep.subr.mxu0 0.0
        %571 = vmatpush1.msra.mxu0 0.0
        %572 = vmatprep.mubr.f32.mxu0 0.0
        %573 = vmatmul.mubr.f32.gmra.mrb[0].mxu0 %v503
        %v574 = vpop.f32.mrb[0].mxu0
        %v575 = vadd.f32 %v500, %v574
        %v576 = vpop.f32.mrb[0].mxu0
        %577 = vmatprep.mubr.f32.mxu0 0.0
        %578 = vmatmul.mubr.f32.gmra.mrb[0].mxu0 %v506
        %v579 = vpop.f32.mrb[0].mxu0
        %v580 = vadd.f32 %v500, %v579
        %v581 = vpop.f32.mrb[0].mxu0
        %582 = vdwg.mxu0
        %v583 = vmul.f32 %v575, 0.2
        %v584 = vmul.f32 %v580, 0.2
        %v585 = vmax.f32 %v575, %v583
        %v586 = vmax.f32 %v580, %v584
        %v587 = vld [vmem:[%s5] sm:$0xff]
        %v588 = vld [vmem:[%s5 + $0x8] sm:$0xff]
        %v589 = vld [vmem:[%s5 + $0x10] sm:$0xff]
        %v590 = vld [vmem:[%s5 + $0x18] sm:$0xff]
        %v591 = vld [vmem:[%s6] sm:$0x1]
        %v593 = vlaneseq
        %v594 = vshrl.u32 %v593, 7
        %v595 = vsub.s32 0, %v594
        %v596 = vrot.slane %v591, %v595
        %v599 = vsel %vm403, %v585, 0
        %v602 = vsel %vm403, %v586, 0
        %604 = vmatprep.subr.mxu0 0.0
        %605 = vmatpush1.msra.mxu0 %v587
        %606 = vmatprep.subr.mxu0 0.0
        %607 = vmatpush1.msra.mxu0 %v588
        %608 = vmatprep.subr.mxu0 0.0
        %609 = vmatpush1.msra.mxu0 %v589
        %610 = vmatprep.subr.mxu0 0.0
        %611 = vmatpush1.msra.mxu0 %v590
        %612 = vmatprep.subr.mxu0 0.0
        %613 = vmatpush1.msra.mxu0 0.0
        %614 = vmatprep.subr.mxu0 0.0
        %615 = vmatpush1.msra.mxu0 0.0
        %616 = vmatprep.subr.mxu0 0.0
        %617 = vmatpush1.msra.mxu0 0.0
        %618 = vmatprep.subr.mxu0 0.0
        %619 = vmatpush1.msra.mxu0 0.0
        %620 = vmatprep.subr.mxu0 0.0
        %621 = vmatpush1.msra.mxu0 0.0
        %622 = vmatprep.subr.mxu0 0.0
        %623 = vmatpush1.msra.mxu0 0.0
        %624 = vmatprep.subr.mxu0 0.0
        %625 = vmatpush1.msra.mxu0 0.0
        %626 = vmatprep.subr.mxu0 0.0
        %627 = vmatpush1.msra.mxu0 0.0
        %628 = vmatprep.subr.mxu0 0.0
        %629 = vmatpush1.msra.mxu0 0.0
        %630 = vmatprep.subr.mxu0 0.0
        %631 = vmatpush1.msra.mxu0 0.0
        %632 = vmatprep.subr.mxu0 0.0
        %633 = vmatpush1.msra.mxu0 0.0
        %634 = vmatprep.subr.mxu0 0.0
        %635 = vmatpush1.msra.mxu0 0.0
        %636 = vmatprep.subr.mxu0 0.0
        %637 = vmatpush1.msra.mxu0 0.0
        %638 = vmatprep.subr.mxu0 0.0
        %639 = vmatpush1.msra.mxu0 0.0
        %640 = vmatprep.subr.mxu0 0.0
        %641 = vmatpush1.msra.mxu0 0.0
        %642 = vmatprep.subr.mxu0 0.0
        %643 = vmatpush1.msra.mxu0 0.0
        %644 = vmatprep.subr.mxu0 0.0
        %645 = vmatpush1.msra.mxu0 0.0
        %646 = vmatprep.subr.mxu0 0.0
        %647 = vmatpush1.msra.mxu0 0.0
        %648 = vmatprep.subr.mxu0 0.0
        %649 = vmatpush1.msra.mxu0 0.0
        %650 = vmatprep.subr.mxu0 0.0
        %651 = vmatpush1.msra.mxu0 0.0
        %652 = vmatprep.subr.mxu0 0.0
        %653 = vmatpush1.msra.mxu0 0.0
        %654 = vmatprep.subr.mxu0 0.0
        %655 = vmatpush1.msra.mxu0 0.0
        %656 = vmatprep.subr.mxu0 0.0
        %657 = vmatpush1.msra.mxu0 0.0
        %658 = vmatprep.subr.mxu0 0.0
        %659 = vmatpush1.msra.mxu0 0.0
        %660 = vmatprep.subr.mxu0 0.0
        %661 = vmatpush1.msra.mxu0 0.0
        %662 = vmatprep.subr.mxu0 0.0
        %663 = vmatpush1.msra.mxu0 0.0
        %664 = vmatprep.subr.mxu0 0.0
        %665 = vmatpush1.msra.mxu0 0.0
        %666 = vmatprep.subr.mxu0 0.0
        %667 = vmatpush1.msra.mxu0 0.0
        %668 = vmatprep.mubr.f32.mxu0 0.0
        %669 = vmatmul.mubr.f32.gmra.mrb[0].mxu0 %v599
        %v670 = vpop.f32.mrb[0].mxu0
        %v671 = vadd.f32 %v596, %v670
        %v672 = vpop.f32.mrb[0].mxu0
        %673 = vmatprep.mubr.f32.mxu0 0.0
        %674 = vmatmul.mubr.f32.gmra.mrb[0].mxu0 %v602
        %v675 = vpop.f32.mrb[0].mxu0
        %v676 = vadd.f32 %v596, %v675
        %v677 = vpop.f32.mrb[0].mxu0
        %678 = vdwg.mxu0
        %vm679 = vcmask 523264
        %680 = vst.msk [vmem:[%s287] sm:$0xff] %vm679, %v671
        %681 = vst.msk [vmem:[%s287 + $0x8] sm:$0xff] %vm679, %v676
        %s682 = sand.u32 %s182, 1
        %s683 = scalar_lea.sflag [#allocation4], %s682
        %s684 = sand.u32 %s182, 1
        %s685 = smul.addr %s684, 16
        %s686 = scalar_lea.vmem [#allocation5], %s685
        // Predicated region
        $region53: #{tpu_custom_call.1} parent=47 // pred_check
          %p687 = pneg %p192
        $region54: #{tpu_custom_call.1} parent=47 // pred_check_branch
          %689 = sbr.rel (%p687) target = $region56
        $region55: #{tpu_custom_call.1} parent=47 // pred_region
          %s690 = smul.u32 2, %s22
          %s692 = ssub.s32 256, 256
          %693 = vsyncadd %s683, %s692
          %s694 = smul.addr %s690, 128
          %s695 = scalar_lea.hbm %s7, %s694
          %s696 = sshll.u32 %s686, 4
          %s697 = int_to_ptr.vmem [resolvable:$true] %s696
          %702 = dma.vmem_to_hbm [thread:$0]  %s697, 256, %s695, %s683, 128, 128, 8
        $region56: #{tpu_custom_call.1} parent=47 // pred_fallthru
          _
      $region48: #{tpu_custom_call.1} parent=5 // pred_fallthru
        _
      %p703 = scmp.le.s32.totalorder 2, %s17
      // Predicated region
      $region57: #{tpu_custom_call.1} parent=5 // pred_check
        %p704 = pneg %p703
      $region58: #{tpu_custom_call.1} parent=5 // pred_check_branch
        %706 = sbr.rel (%p704) target = $region60
      $region59: #{tpu_custom_call.1} parent=5 // pred_region
        %s707 = ssub.s32 %s17, 2
        // Predicated region
        $region61: #{tpu_custom_call.1} parent=59 // pred_check
          %p708 = pneg %p198
        $region62: #{tpu_custom_call.1} parent=59 // pred_check_branch
          %710 = sbr.rel (%p708) target = $region64
        $region63: #{tpu_custom_call.1} parent=59 // pred_region
          %s711 = sand.u32 %s183, 1
          %s712 = scalar_lea.sflag [#allocation4], %s711
          %s713 = sand.u32 %s183, 1
          %s714 = smul.addr %s713, 16
          %s715 = scalar_lea.vmem [#allocation5], %s714
          %716 = dma.done %s712, 256
        $region64: #{tpu_custom_call.1} parent=59 // pred_fallthru
          _
      $region60: #{tpu_custom_call.1} parent=5 // pred_fallthru
        _
    $region6: #{tpu_custom_call.1} parent=1 // loop_footer
      %s21 = sadd.s32 1, %s17
    $region7: #{tpu_custom_call.1} parent=1 // loop_footer_branch
      %16 = sbr.rel target = $region3
    $region8: #{tpu_custom_call.1} parent=1 // loop_exit
      _
    %717 = vsyncpa [#allocation3], 1
    %s718 = scalar_lea.sflag [#allocation3], 1
    %719 = vsyncpa %s718, 1
    %720 = vsyncpa [#allocation4], 1
    %s721 = scalar_lea.sflag [#allocation4], 1
    %722 = vsyncpa %s721, 1

</llo_original>
